<compile_context>
chip_gen: v7x
topology: tpu7x:2x2x1
jax: 0.10.0
libtpu: 0.0.40
codegen_flags: <defaults>
</compile_context>

<pallas_src>
import functools

import jax
import jax.numpy as jnp
from jax.experimental import pallas as pl
from jax.experimental.pallas import tpu as pltpu


def _conv1x1_kernel(w_ref, x_ref, o_ref, *, b_tile):
    # w_ref: (C_out, C_in)        weight, resident across the whole grid
    # x_ref: (b_tile, C_in, HW)   a group of batch elements, channels-major
    # o_ref: (b_tile, C_out, HW)  lane axis = HW
    w = w_ref[...]
    for i in range(b_tile):  # static unroll; weight stays hot for every matmul
        acc = jnp.dot(w, x_ref[i], preferred_element_type=jnp.float32)
        # TODO(synk): fuse downstream pointwise consumers (bias / BN scale,
        # ReLU/GELU, residual add) here while the (C_out, HW) slab is in VMEM;
        # this module has none, so the matmul result is stored directly.
        o_ref[i] = acc.astype(o_ref.dtype)


def conv2d_1x1(x_nchw: jax.Array, weight_oikk: jax.Array, *, batch_tile: int = 8) -> jax.Array:
    """1x1 stride-1 conv, no bias.

    x_nchw: (N, C_in, H, W); weight: (C_out, C_in, 1, 1).
    Returns (N, C_out, H, W) in the activation dtype (f32 accumulate).
    """
    n, c_in, h, w = x_nchw.shape
    c_out = weight_oikk.shape[0]
    hw = h * w
    dtype = x_nchw.dtype

    # Pure reshapes — contiguous views, no transposes, no HBM data movement.
    x3 = x_nchw.reshape(n, c_in, hw)
    w_mat = weight_oikk.reshape(c_out, c_in).astype(dtype)

    # Amortize per-grid-step overhead over several batch elements: largest
    # tile <= batch_tile that divides N, so every block is full (no partial
    # batch blocks to worry about).  For N == 1 this degenerates to the
    # single-block case.
    b_tile = max(1, min(n, batch_tile))
    while n % b_tile:
        b_tile -= 1
    grid = (n // b_tile,)

    itemsize = jnp.dtype(dtype).itemsize

    # All operands fit comfortably in VMEM as single blocks at this size
    # (x tile <= 8*288*196*4 B ~= 1.8 MiB), so no K or HW tiling is needed.
    # TODO(synk): if H*W grows large, tile the HW axis in >=512-lane multiples
    # of 128 and size (weight + double-buffered tiles) against v7x's 64 MiB
    # VMEM (32 MiB scoped default); also pad HW to a multiple of 128 at the
    # producer (196 -> 256) once there is a fused consumer to absorb the pad.
    out3 = pl.pallas_call(
        functools.partial(_conv1x1_kernel, b_tile=b_tile),
        out_shape=jax.ShapeDtypeStruct((n, c_out, hw), dtype),
        grid=grid,
        in_specs=[
            pl.BlockSpec((c_out, c_in), lambda b: (0, 0)),         # weight, resident
            pl.BlockSpec((b_tile, c_in, hw), lambda b: (b, 0, 0)),  # batch group
        ],
        out_specs=pl.BlockSpec((b_tile, c_out, hw), lambda b: (b, 0, 0)),
        compiler_params=pltpu.CompilerParams(
            dimension_semantics=("parallel",),
        ),
        cost_estimate=pl.CostEstimate(
            flops=2 * n * hw * c_in * c_out,
            bytes_accessed=itemsize * (n * hw * c_in + c_in * c_out + n * hw * c_out),
            transcendentals=0,
        ),
    )(w_mat, x3)

    return out3.reshape(n, c_out, h, w)


if __name__ == "__main__":
    key = jax.random.PRNGKey(0)
    kx, kw, kx2 = jax.random.split(key, 3)

    # Shapes implied by the module: input (1, 288, 14, 14), weight (88, 288, 1, 1)
    x131 = jax.random.normal(kx, (1, 288, 14, 14), dtype=jnp.float32)
    weight = jax.random.normal(kw, (88, 288, 1, 1), dtype=jnp.float32) * 0.05
    w_mat = weight.reshape(88, 288)

    # --- f32, N=1 (exact module spec) ---
    out = conv2d_1x1(x131, weight)
    out = jax.block_until_ready(out)
    ref = jnp.einsum("nchw,oc->nohw", x131, w_mat)
    assert out.shape == (1, 88, 14, 14), out.shape
    assert jnp.allclose(out, ref, atol=1e-4, rtol=1e-4)

    # --- f32, N=4: exercises the batch-tiled path (one grid step, b_tile=4) ---
    x_b4 = jax.random.normal(kx2, (4, 288, 14, 14), dtype=jnp.float32)
    out_b4 = jax.block_until_ready(conv2d_1x1(x_b4, weight))
    ref_b4 = jnp.einsum("nchw,oc->nohw", x_b4, w_mat)
    assert out_b4.shape == (4, 88, 14, 14), out_b4.shape
    assert jnp.allclose(out_b4, ref_b4, atol=1e-4, rtol=1e-4)

    print("KERNEL_OK")
</pallas_src>

<mosaic_0001>
module attributes {stable_mosaic.version = 11 : i64} {
  func.func @_conv1x1_kernel(%arg0: i32, %arg1: memref<88x288xf32, #tpu.memory_space<vmem>>, %arg2: memref<1x288x196xf32, #tpu.memory_space<vmem>>, %arg3: memref<1x88x196xf32, #tpu.memory_space<vmem>>) attributes {dimension_semantics = [#tpu.dimension_semantics<parallel>], iteration_bounds = array<i64: 1>, scalar_prefetch = 0 : i64, scratch_operands = 0 : i64, tpu.core_type = #tpu.core_type<tc>, window_params = [{pipeline_mode = #tpu.pipeline_mode<synchronous>, transform_indices = @transform_0, window_bounds = array<i64: 88, 288>}, {transform_indices = @transform_1, window_bounds = array<i64: 1, 288, 196>}, {transform_indices = @transform_2, window_bounds = array<i64: 1, 88, 196>}]} {
    %c0 = arith.constant 0 : index
    %c0_0 = arith.constant 0 : index
    %0 = vector.load %arg1[%c0, %c0_0] : memref<88x288xf32, #tpu.memory_space<vmem>>, vector<88x288xf32>
    %c0_1 = arith.constant 0 : index
    %c0_2 = arith.constant 0 : index
    %c0_3 = arith.constant 0 : index
    %1 = vector.load %arg2[%c0_1, %c0_2, %c0_3] : memref<1x288x196xf32, #tpu.memory_space<vmem>>, vector<1x288x196xf32>
    %2 = vector.shape_cast %1 : vector<1x288x196xf32> to vector<288x196xf32>
    %cst = arith.constant dense<0.000000e+00> : vector<88x196xf32>
    %3 = tpu.matmul %0, %2, %cst {dimension_numbers = #tpu.dot_dimension_numbers<[1], [0], [0], [1], [0, 0, 1, 1], [], []>} : vector<88x288xf32>, vector<288x196xf32>, vector<88x196xf32> -> vector<88x196xf32>
    %c0_4 = arith.constant 0 : index
    %c0_5 = arith.constant 0 : index
    %c0_6 = arith.constant 0 : index
    %4 = vector.load %arg3[%c0_4, %c0_5, %c0_6] : memref<1x88x196xf32, #tpu.memory_space<vmem>>, vector<1x88x196xf32>
    %5 = vector.shape_cast %4 : vector<1x88x196xf32> to vector<88x196xf32>
    %6 = vector.shape_cast %3 : vector<88x196xf32> to vector<1x88x196xf32>
    tpu.vector_store %arg3[%c0_4, %c0_5, %c0_6], %6 {strides = array<i32>} : memref<1x88x196xf32, #tpu.memory_space<vmem>>, vector<1x88x196xf32>,
    return
  }
  func.func @transform_0(%arg0: i32) -> (i32, i32) {
    %c0_i32 = arith.constant 0 : i32
    %c0_i32_0 = arith.constant 0 : i32
    %c0_i32_1 = arith.constant 0 : i32
    return %c0_i32, %c0_i32_0 : i32, i32
  }
  func.func @transform_1(%arg0: i32) -> (i32, i32, i32) {
    %c0_i32 = arith.constant 0 : i32
    %c0_i32_0 = arith.constant 0 : i32
    %c0_i32_1 = arith.constant 0 : i32
    return %arg0, %c0_i32, %c0_i32_0 : i32, i32, i32
  }
  func.func @transform_2(%arg0: i32) -> (i32, i32, i32) {
    %c0_i32 = arith.constant 0 : i32
    %c0_i32_0 = arith.constant 0 : i32
    %c0_i32_1 = arith.constant 0 : i32
    return %arg0, %c0_i32, %c0_i32_0 : i32, i32, i32
  }
}

</mosaic_0001>

<llo_original>
// kernel: tpu_custom_call.1
$region0: #{tpu_custom_call.1}
  #allocation0 [shape = 'u32[]', space=smem, size = 0x4, offset = 0x4, fixed_abs, tag = 'smem constant byte address 0x4 - core index']
  #allocation1 [shape = 'u32[144,128]{1,0:T(1,128)}', space=vmem, size = 0x12000, scoped, tag = 'internal scratch']
  %s0 = inlined_call_operand.hbm [shape: f32[88,288], index: 0, kind: input, shape index: {}]
  %s1 = inlined_call_operand.hbm [shape: f32[1,288,196], index: 1, kind: input, shape index: {}]
  %s2 = inlined_call_operand.hbm [shape: f32[1,88,196], index: 2, kind: output, shape index: {}]
  %s3 = sld [smem:[#allocation0]]
  $region26: #{tpu_custom_call.1} parent=0
    _
  %s5 = ssub.s32 1, %s3
  %s6 = scalar_select 0, %s5, %s3
  $region1: #{tpu_custom_call.1} parent=0
    #allocation2 [shape = 'u8[135168]{0}', space=vmem, size = 0x21000, scoped, tag = 'input window, operand 0, single buffered']
    #allocation3 [shape = 's32[1]{0}', space=sflag, size = 0x4, scoped, tag = 'scoped memory for tpu_custom_call.1']
    #allocation4 [shape = 's32[1]{0}', space=sflag, size = 0x4, scoped, tag = 'scoped memory for tpu_custom_call.1']
    #allocation5 [shape = 'u8[294912]{0}', space=vmem, size = 0x48000, scoped, tag = 'input window, operand 1, single buffered']
    #allocation6 [shape = 's32[1]{0}', space=sflag, size = 0x4, scoped, tag = 'scoped memory for tpu_custom_call.1']
    #allocation7 [shape = 'u8[90112]{0}', space=vmem, size = 0x16000, scoped, tag = 'output window, operand 0, single buffered']
    %7 = vsyncpa [#allocation3], 0
    %8 = vsyncpa [#allocation6], 0
    %9 = vsyncpa [#allocation4], 0
    // Predicated region
    $region2: #{tpu_custom_call.1} parent=1 // pred_check
      _
    $region3: #{tpu_custom_call.1} parent=1 // pred_check_branch
      %11 = sbr.rel (0) target = $region5
    $region4: #{tpu_custom_call.1} parent=1 // pred_region
      %s13 = ssub.s32 4224, 4224
      %14 = vsyncadd [#allocation3], %s13
      %s15 = sshll.u32 [#allocation2], 4
      %s16 = int_to_ptr.vmem [resolvable:$true] %s15
      %21 = dma.hbm_to_vmem [thread:$0]  %s0, 4224, %s16, [#allocation3], 384, 384, 24
    $region5: #{tpu_custom_call.1} parent=1 // pred_fallthru
      _
    // Predicated region
    $region6: #{tpu_custom_call.1} parent=1 // pred_check
      _
    $region7: #{tpu_custom_call.1} parent=1 // pred_check_branch
      %23 = sbr.rel (0) target = $region9
    $region8: #{tpu_custom_call.1} parent=1 // pred_region
      %s25 = ssub.s32 9216, 9216
      %26 = vsyncadd [#allocation6], %s25
      %s27 = sshll.u32 [#allocation5], 4
      %s28 = int_to_ptr.vmem [resolvable:$true] %s27
      %33 = dma.hbm_to_vmem [thread:$0]  %s1, 9216, %s28, [#allocation6], 256, 256, 16
    $region9: #{tpu_custom_call.1} parent=1 // pred_fallthru
      _
    // Predicated region
    $region10: #{tpu_custom_call.1} parent=1 // pred_check
      _
    $region11: #{tpu_custom_call.1} parent=1 // pred_check_branch
      %35 = sbr.rel (0) target = $region13
    $region12: #{tpu_custom_call.1} parent=1 // pred_region
      %36 = dma.done [#allocation3], 4224
    $region13: #{tpu_custom_call.1} parent=1 // pred_fallthru
      _
    // Predicated region
    $region14: #{tpu_custom_call.1} parent=1 // pred_check
      _
    $region15: #{tpu_custom_call.1} parent=1 // pred_check_branch
      %38 = sbr.rel (0) target = $region17
    $region16: #{tpu_custom_call.1} parent=1 // pred_region
      %39 = dma.done [#allocation6], 9216
    $region17: #{tpu_custom_call.1} parent=1 // pred_fallthru
      _
    %v40 = vld [vmem:[#allocation2] sm:$0xff]
    %v41 = vld [vmem:[#allocation2 + $0x8] sm:$0xff]
    %v42 = vld [vmem:[#allocation2 + $0x10] sm:$0xff]
    %v43 = vld [vmem:[#allocation2 + $0x18] sm:$0xff]
    %v44 = vld [vmem:[#allocation2 + $0x20] sm:$0xff]
    %v45 = vld [vmem:[#allocation2 + $0x28] sm:$0xff]
    %v46 = vld [vmem:[#allocation2 + $0x30] sm:$0xff]
    %v47 = vld [vmem:[#allocation2 + $0x38] sm:$0xff]
    %v48 = vld [vmem:[#allocation2 + $0x40] sm:$0xff]
    %v49 = vld [vmem:[#allocation2 + $0x48] sm:$0xff]
    %v50 = vld [vmem:[#allocation2 + $0x50] sm:$0xff]
    %v51 = vld [vmem:[#allocation2 + $0x58] sm:$0xff]
    %v52 = vld [vmem:[#allocation2 + $0x60] sm:$0xff]
    %v53 = vld [vmem:[#allocation2 + $0x68] sm:$0xff]
    %v54 = vld [vmem:[#allocation2 + $0x70] sm:$0xff]
    %v55 = vld [vmem:[#allocation2 + $0x78] sm:$0xff]
    %v56 = vld [vmem:[#allocation2 + $0x80] sm:$0xff]
    %v57 = vld [vmem:[#allocation2 + $0x88] sm:$0xff]
    %v58 = vld [vmem:[#allocation2 + $0x90] sm:$0xff]
    %v59 = vld [vmem:[#allocation2 + $0x98] sm:$0xff]
    %v60 = vld [vmem:[#allocation2 + $0xa0] sm:$0xff]
    %v61 = vld [vmem:[#allocation2 + $0xa8] sm:$0xff]
    %v62 = vld [vmem:[#allocation2 + $0xb0] sm:$0xff]
    %v63 = vld [vmem:[#allocation2 + $0xb8] sm:$0xff]
    %v64 = vld [vmem:[#allocation2 + $0xc0] sm:$0xff]
    %v65 = vld [vmem:[#allocation2 + $0xc8] sm:$0xff]
    %v66 = vld [vmem:[#allocation2 + $0xd0] sm:$0xff]
    %v67 = vld [vmem:[#allocation2 + $0xd8] sm:$0xff]
    %v68 = vld [vmem:[#allocation2 + $0xe0] sm:$0xff]
    %v69 = vld [vmem:[#allocation2 + $0xe8] sm:$0xff]
    %v70 = vld [vmem:[#allocation2 + $0xf0] sm:$0xff]
    %v71 = vld [vmem:[#allocation2 + $0xf8] sm:$0xff]
    %v72 = vld [vmem:[#allocation2 + $0x100] sm:$0xff]
    %v73 = vld [vmem:[#allocation5] sm:$0xff]
    %v74 = vld [vmem:[#allocation5 + $0x8] sm:$0xff]
    %v75 = vld [vmem:[#allocation5 + $0x10] sm:$0xff]
    %v76 = vld [vmem:[#allocation5 + $0x18] sm:$0xff]
    %v77 = vld [vmem:[#allocation5 + $0x20] sm:$0xff]
    %v78 = vld [vmem:[#allocation5 + $0x28] sm:$0xff]
    %v79 = vld [vmem:[#allocation5 + $0x30] sm:$0xff]
    %v80 = vld [vmem:[#allocation5 + $0x38] sm:$0xff]
    %v81 = vld [vmem:[#allocation5 + $0x40] sm:$0xff]
    %v82 = vld [vmem:[#allocation5 + $0x48] sm:$0xff]
    %v83 = vld [vmem:[#allocation5 + $0x50] sm:$0xff]
    %v84 = vld [vmem:[#allocation5 + $0x58] sm:$0xff]
    %v85 = vld [vmem:[#allocation5 + $0x60] sm:$0xff]
    %v86 = vld [vmem:[#allocation5 + $0x68] sm:$0xff]
    %v87 = vld [vmem:[#allocation5 + $0x70] sm:$0xff]
    %v88 = vld [vmem:[#allocation5 + $0x78] sm:$0xff]
    %v89 = vld [vmem:[#allocation5 + $0x80] sm:$0xff]
    %v90 = vld [vmem:[#allocation5 + $0x88] sm:$0xff]
    %v91 = vld [vmem:[#allocation5 + $0x90] sm:$0xff]
    %v92 = vld [vmem:[#allocation5 + $0x98] sm:$0xff]
    %v93 = vld [vmem:[#allocation5 + $0xa0] sm:$0xff]
    %v94 = vld [vmem:[#allocation5 + $0xa8] sm:$0xff]
    %v95 = vld [vmem:[#allocation5 + $0xb0] sm:$0xff]
    %v96 = vld [vmem:[#allocation5 + $0xb8] sm:$0xff]
    %v97 = vld [vmem:[#allocation5 + $0xc0] sm:$0xff]
    %v98 = vld [vmem:[#allocation5 + $0xc8] sm:$0xff]
    %v99 = vld [vmem:[#allocation5 + $0xd0] sm:$0xff]
    %v100 = vld [vmem:[#allocation5 + $0xd8] sm:$0xff]
    %v101 = vld [vmem:[#allocation5 + $0xe0] sm:$0xff]
    %v102 = vld [vmem:[#allocation5 + $0xe8] sm:$0xff]
    %v103 = vld [vmem:[#allocation5 + $0xf0] sm:$0xff]
    %v104 = vld [vmem:[#allocation5 + $0xf8] sm:$0xff]
    %v105 = vld [vmem:[#allocation5 + $0x100] sm:$0xff]
    %v106 = vld [vmem:[#allocation5 + $0x108] sm:$0xff]
    %v107 = vld [vmem:[#allocation5 + $0x110] sm:$0xff]
    %v108 = vld [vmem:[#allocation5 + $0x118] sm:$0xff]
    %v109 = vld [vmem:[#allocation5 + $0x120] sm:$0xff]
    %v110 = vld [vmem:[#allocation5 + $0x128] sm:$0xff]
    %v111 = vld [vmem:[#allocation5 + $0x130] sm:$0xff]
    %v112 = vld [vmem:[#allocation5 + $0x138] sm:$0xff]
    %v113 = vld [vmem:[#allocation5 + $0x140] sm:$0xff]
    %v114 = vld [vmem:[#allocation5 + $0x148] sm:$0xff]
    %v115 = vld [vmem:[#allocation5 + $0x150] sm:$0xff]
    %v116 = vld [vmem:[#allocation5 + $0x158] sm:$0xff]
    %v117 = vld [vmem:[#allocation5 + $0x160] sm:$0xff]
    %v118 = vld [vmem:[#allocation5 + $0x168] sm:$0xff]
    %v119 = vld [vmem:[#allocation5 + $0x170] sm:$0xff]
    %v120 = vld [vmem:[#allocation5 + $0x178] sm:$0xff]
    %v121 = vld [vmem:[#allocation5 + $0x180] sm:$0xff]
    %v122 = vld [vmem:[#allocation5 + $0x188] sm:$0xff]
    %v123 = vld [vmem:[#allocation5 + $0x190] sm:$0xff]
    %v124 = vld [vmem:[#allocation5 + $0x198] sm:$0xff]
    %v125 = vld [vmem:[#allocation5 + $0x1a0] sm:$0xff]
    %v126 = vld [vmem:[#allocation5 + $0x1a8] sm:$0xff]
    %v127 = vld [vmem:[#allocation5 + $0x1b0] sm:$0xff]
    %v128 = vld [vmem:[#allocation5 + $0x1b8] sm:$0xff]
    %v129 = vld [vmem:[#allocation5 + $0x1c0] sm:$0xff]
    %v130 = vld [vmem:[#allocation5 + $0x1c8] sm:$0xff]
    %v131 = vld [vmem:[#allocation5 + $0x1d0] sm:$0xff]
    %v132 = vld [vmem:[#allocation5 + $0x1d8] sm:$0xff]
    %v133 = vld [vmem:[#allocation5 + $0x1e0] sm:$0xff]
    %v134 = vld [vmem:[#allocation5 + $0x1e8] sm:$0xff]
    %v135 = vld [vmem:[#allocation5 + $0x1f0] sm:$0xff]
    %v136 = vld [vmem:[#allocation5 + $0x1f8] sm:$0xff]
    %v137 = vld [vmem:[#allocation5 + $0x200] sm:$0xff]
    %v138 = vld [vmem:[#allocation5 + $0x208] sm:$0xff]
    %v139 = vld [vmem:[#allocation5 + $0x210] sm:$0xff]
    %v140 = vld [vmem:[#allocation5 + $0x218] sm:$0xff]
    %v141 = vld [vmem:[#allocation5 + $0x220] sm:$0xff]
    %v142 = vld [vmem:[#allocation5 + $0x228] sm:$0xff]
    %v143 = vld [vmem:[#allocation5 + $0x230] sm:$0xff]
    %v144 = vld [vmem:[#allocation5 + $0x238] sm:$0xff]
    %vm145 = vcmask 261120
    %v147 = vsel %vm145, %v42, 0
    %v150 = vsel %vm145, %v45, 0
    %v153 = vsel %vm145, %v48, 0
    %v156 = vsel %vm145, %v51, 0
    %v159 = vsel %vm145, %v54, 0
    %v162 = vsel %vm145, %v57, 0
    %v165 = vsel %vm145, %v60, 0
    %v168 = vsel %vm145, %v63, 0
    %v171 = vsel %vm145, %v66, 0
    %v174 = vsel %vm145, %v69, 0
    %v177 = vsel %vm145, %v72, 0
    %179 = vmatprep.subr.mxu0 %v74
    %180 = vmatpush1.msra.mxu0 %v73
    %181 = vmatprep.subr.mxu0 %v76
    %182 = vmatpush1.msra.mxu0 %v75
    %183 = vmatprep.subr.mxu0 %v78
    %184 = vmatpush1.msra.mxu0 %v77
    %185 = vmatprep.subr.mxu0 %v80
    %186 = vmatpush1.msra.mxu0 %v79
    %187 = vmatprep.subr.mxu0 %v82
    %188 = vmatpush1.msra.mxu0 %v81
    %189 = vmatprep.subr.mxu0 %v84
    %190 = vmatpush1.msra.mxu0 %v83
    %191 = vmatprep.subr.mxu0 %v86
    %192 = vmatpush1.msra.mxu0 %v85
    %193 = vmatprep.subr.mxu0 %v88
    %194 = vmatpush1.msra.mxu0 %v87
    %195 = vmatprep.subr.mxu0 %v90
    %196 = vmatpush1.msra.mxu0 %v89
    %197 = vmatprep.subr.mxu0 %v92
    %198 = vmatpush1.msra.mxu0 %v91
    %199 = vmatprep.subr.mxu0 %v94
    %200 = vmatpush1.msra.mxu0 %v93
    %201 = vmatprep.subr.mxu0 %v96
    %202 = vmatpush1.msra.mxu0 %v95
    %203 = vmatprep.subr.mxu0 %v98
    %204 = vmatpush1.msra.mxu0 %v97
    %205 = vmatprep.subr.mxu0 %v100
    %206 = vmatpush1.msra.mxu0 %v99
    %207 = vmatprep.subr.mxu0 %v102
    %208 = vmatpush1.msra.mxu0 %v101
    %209 = vmatprep.subr.mxu0 %v104
    %210 = vmatpush1.msra.mxu0 %v103
    %211 = vmatprep.subr.mxu0 %v106
    %212 = vmatpush1.msra.mxu0 %v105
    %213 = vmatprep.subr.mxu0 %v108
    %214 = vmatpush1.msra.mxu0 %v107
    %215 = vmatprep.subr.mxu0 %v110
    %216 = vmatpush1.msra.mxu0 %v109
    %217 = vmatprep.subr.mxu0 %v112
    %218 = vmatpush1.msra.mxu0 %v111
    %219 = vmatprep.subr.mxu0 %v114
    %220 = vmatpush1.msra.mxu0 %v113
    %221 = vmatprep.subr.mxu0 %v116
    %222 = vmatpush1.msra.mxu0 %v115
    %223 = vmatprep.subr.mxu0 %v118
    %224 = vmatpush1.msra.mxu0 %v117
    %225 = vmatprep.subr.mxu0 %v120
    %226 = vmatpush1.msra.mxu0 %v119
    %227 = vmatprep.subr.mxu0 %v122
    %228 = vmatpush1.msra.mxu0 %v121
    %229 = vmatprep.subr.mxu0 %v124
    %230 = vmatpush1.msra.mxu0 %v123
    %231 = vmatprep.subr.mxu0 %v126
    %232 = vmatpush1.msra.mxu0 %v125
    %233 = vmatprep.subr.mxu0 %v128
    %234 = vmatpush1.msra.mxu0 %v127
    %235 = vmatprep.subr.mxu0 %v130
    %236 = vmatpush1.msra.mxu0 %v129
    %237 = vmatprep.subr.mxu0 %v132
    %238 = vmatpush1.msra.mxu0 %v131
    %239 = vmatprep.subr.mxu0 %v134
    %240 = vmatpush1.msra.mxu0 %v133
    %241 = vmatprep.subr.mxu0 %v136
    %242 = vmatpush1.msra.mxu0 %v135
    %243 = vmatprep.mubr.f32.mxu0 %v41
    %244 = vmatmul.mubr.f32.gmra.mrb[0].mxu0 %v40
    %v245 = vpop.f32.mrb[0].mxu0
    %v246 = vadd.f32 0.0, %v245
    %v247 = vpop.f32.mrb[0].mxu0
    %v248 = vadd.f32 0.0, %v247
    %249 = vmatprep.mubr.f32.mxu0 %v44
    %250 = vmatmul.mubr.f32.gmra.mrb[0].mxu0 %v43
    %v251 = vpop.f32.mrb[0].mxu0
    %v252 = vadd.f32 0.0, %v251
    %v253 = vpop.f32.mrb[0].mxu0
    %v254 = vadd.f32 0.0, %v253
    %255 = vmatprep.mubr.f32.mxu0 %v47
    %256 = vmatmul.mubr.f32.gmra.mrb[0].mxu0 %v46
    %v257 = vpop.f32.mrb[0].mxu0
    %v258 = vadd.f32 0.0, %v257
    %v259 = vpop.f32.mrb[0].mxu0
    %v260 = vadd.f32 0.0, %v259
    %261 = vmatprep.mubr.f32.mxu0 %v50
    %262 = vmatmul.mubr.f32.gmra.mrb[0].mxu0 %v49
    %v263 = vpop.f32.mrb[0].mxu0
    %v264 = vadd.f32 0.0, %v263
    %v265 = vpop.f32.mrb[0].mxu0
    %v266 = vadd.f32 0.0, %v265
    %267 = vmatprep.mubr.f32.mxu0 %v53
    %268 = vmatmul.mubr.f32.gmra.mrb[0].mxu0 %v52
    %v269 = vpop.f32.mrb[0].mxu0
    %v270 = vadd.f32 0.0, %v269
    %v271 = vpop.f32.mrb[0].mxu0
    %v272 = vadd.f32 0.0, %v271
    %273 = vmatprep.mubr.f32.mxu0 %v56
    %274 = vmatmul.mubr.f32.gmra.mrb[0].mxu0 %v55
    %v275 = vpop.f32.mrb[0].mxu0
    %v276 = vadd.f32 0.0, %v275
    %v277 = vpop.f32.mrb[0].mxu0
    %v278 = vadd.f32 0.0, %v277
    %279 = vmatprep.mubr.f32.mxu0 %v59
    %280 = vmatmul.mubr.f32.gmra.mrb[0].mxu0 %v58
    %v281 = vpop.f32.mrb[0].mxu0
    %v282 = vadd.f32 0.0, %v281
    %v283 = vpop.f32.mrb[0].mxu0
    %v284 = vadd.f32 0.0, %v283
    %285 = vmatprep.mubr.f32.mxu0 %v62
    %286 = vmatmul.mubr.f32.gmra.mrb[0].mxu0 %v61
    %v287 = vpop.f32.mrb[0].mxu0
    %v288 = vadd.f32 0.0, %v287
    %v289 = vpop.f32.mrb[0].mxu0
    %v290 = vadd.f32 0.0, %v289
    %291 = vmatprep.mubr.f32.mxu0 %v65
    %292 = vmatmul.mubr.f32.gmra.mrb[0].mxu0 %v64
    %v293 = vpop.f32.mrb[0].mxu0
    %v294 = vadd.f32 0.0, %v293
    %v295 = vpop.f32.mrb[0].mxu0
    %v296 = vadd.f32 0.0, %v295
    %297 = vmatprep.mubr.f32.mxu0 %v68
    %298 = vmatmul.mubr.f32.gmra.mrb[0].mxu0 %v67
    %v299 = vpop.f32.mrb[0].mxu0
    %v300 = vadd.f32 0.0, %v299
    %v301 = vpop.f32.mrb[0].mxu0
    %v302 = vadd.f32 0.0, %v301
    %303 = vmatprep.mubr.f32.mxu0 %v71
    %304 = vmatmul.mubr.f32.gmra.mrb[0].mxu0 %v70
    %v305 = vpop.f32.mrb[0].mxu0
    %v306 = vadd.f32 0.0, %v305
    %v307 = vpop.f32.mrb[0].mxu0
    %v308 = vadd.f32 0.0, %v307
    %309 = vdwg.mxu0
    %310 = vmatprep.subr.mxu0 %v138
    %311 = vmatpush1.msra.mxu0 %v137
    %312 = vmatprep.subr.mxu0 %v140
    %313 = vmatpush1.msra.mxu0 %v139
    %314 = vmatprep.subr.mxu0 %v142
    %315 = vmatpush1.msra.mxu0 %v141
    %316 = vmatprep.subr.mxu0 %v144
    %317 = vmatpush1.msra.mxu0 %v143
    %318 = vmatprep.subr.mxu0 0.0
    %319 = vmatpush1.msra.mxu0 0.0
    %320 = vmatprep.subr.mxu0 0.0
    %321 = vmatpush1.msra.mxu0 0.0
    %322 = vmatprep.subr.mxu0 0.0
    %323 = vmatpush1.msra.mxu0 0.0
    %324 = vmatprep.subr.mxu0 0.0
    %325 = vmatpush1.msra.mxu0 0.0
    %326 = vmatprep.subr.mxu0 0.0
    %327 = vmatpush1.msra.mxu0 0.0
    %328 = vmatprep.subr.mxu0 0.0
    %329 = vmatpush1.msra.mxu0 0.0
    %330 = vmatprep.subr.mxu0 0.0
    %331 = vmatpush1.msra.mxu0 0.0
    %332 = vmatprep.subr.mxu0 0.0
    %333 = vmatpush1.msra.mxu0 0.0
    %334 = vmatprep.subr.mxu0 0.0
    %335 = vmatpush1.msra.mxu0 0.0
    %336 = vmatprep.subr.mxu0 0.0
    %337 = vmatpush1.msra.mxu0 0.0
    %338 = vmatprep.subr.mxu0 0.0
    %339 = vmatpush1.msra.mxu0 0.0
    %340 = vmatprep.subr.mxu0 0.0
    %341 = vmatpush1.msra.mxu0 0.0
    %342 = vmatprep.subr.mxu0 0.0
    %343 = vmatpush1.msra.mxu0 0.0
    %344 = vmatprep.subr.mxu0 0.0
    %345 = vmatpush1.msra.mxu0 0.0
    %346 = vmatprep.subr.mxu0 0.0
    %347 = vmatpush1.msra.mxu0 0.0
    %348 = vmatprep.subr.mxu0 0.0
    %349 = vmatpush1.msra.mxu0 0.0
    %350 = vmatprep.subr.mxu0 0.0
    %351 = vmatpush1.msra.mxu0 0.0
    %352 = vmatprep.subr.mxu0 0.0
    %353 = vmatpush1.msra.mxu0 0.0
    %354 = vmatprep.subr.mxu0 0.0
    %355 = vmatpush1.msra.mxu0 0.0
    %356 = vmatprep.subr.mxu0 0.0
    %357 = vmatpush1.msra.mxu0 0.0
    %358 = vmatprep.subr.mxu0 0.0
    %359 = vmatpush1.msra.mxu0 0.0
    %360 = vmatprep.subr.mxu0 0.0
    %361 = vmatpush1.msra.mxu0 0.0
    %362 = vmatprep.subr.mxu0 0.0
    %363 = vmatpush1.msra.mxu0 0.0
    %364 = vmatprep.subr.mxu0 0.0
    %365 = vmatpush1.msra.mxu0 0.0
    %366 = vmatprep.subr.mxu0 0.0
    %367 = vmatpush1.msra.mxu0 0.0
    %368 = vmatprep.subr.mxu0 0.0
    %369 = vmatpush1.msra.mxu0 0.0
    %370 = vmatprep.subr.mxu0 0.0
    %371 = vmatpush1.msra.mxu0 0.0
    %372 = vmatprep.subr.mxu0 0.0
    %373 = vmatpush1.msra.mxu0 0.0
    %374 = vmatprep.mubr.f32.mxu0 0.0
    %375 = vmatmul.mubr.f32.gmra.mrb[0].mxu0 %v147
    %v376 = vpop.f32.mrb[0].mxu0
    %v377 = vadd.f32 %v246, %v376
    %v378 = vpop.f32.mrb[0].mxu0
    %v379 = vadd.f32 %v248, %v378
    %380 = vmatprep.mubr.f32.mxu0 0.0
    %381 = vmatmul.mubr.f32.gmra.mrb[0].mxu0 %v150
    %v382 = vpop.f32.mrb[0].mxu0
    %v383 = vadd.f32 %v252, %v382
    %v384 = vpop.f32.mrb[0].mxu0
    %v385 = vadd.f32 %v254, %v384
    %386 = vmatprep.mubr.f32.mxu0 0.0
    %387 = vmatmul.mubr.f32.gmra.mrb[0].mxu0 %v153
    %v388 = vpop.f32.mrb[0].mxu0
    %v389 = vadd.f32 %v258, %v388
    %v390 = vpop.f32.mrb[0].mxu0
    %v391 = vadd.f32 %v260, %v390
    %392 = vmatprep.mubr.f32.mxu0 0.0
    %393 = vmatmul.mubr.f32.gmra.mrb[0].mxu0 %v156
    %v394 = vpop.f32.mrb[0].mxu0
    %v395 = vadd.f32 %v264, %v394
    %v396 = vpop.f32.mrb[0].mxu0
    %v397 = vadd.f32 %v266, %v396
    %398 = vmatprep.mubr.f32.mxu0 0.0
    %399 = vmatmul.mubr.f32.gmra.mrb[0].mxu0 %v159
    %v400 = vpop.f32.mrb[0].mxu0
    %v401 = vadd.f32 %v270, %v400
    %v402 = vpop.f32.mrb[0].mxu0
    %v403 = vadd.f32 %v272, %v402
    %404 = vmatprep.mubr.f32.mxu0 0.0
    %405 = vmatmul.mubr.f32.gmra.mrb[0].mxu0 %v162
    %v406 = vpop.f32.mrb[0].mxu0
    %v407 = vadd.f32 %v276, %v406
    %v408 = vpop.f32.mrb[0].mxu0
    %v409 = vadd.f32 %v278, %v408
    %410 = vmatprep.mubr.f32.mxu0 0.0
    %411 = vmatmul.mubr.f32.gmra.mrb[0].mxu0 %v165
    %v412 = vpop.f32.mrb[0].mxu0
    %v413 = vadd.f32 %v282, %v412
    %v414 = vpop.f32.mrb[0].mxu0
    %v415 = vadd.f32 %v284, %v414
    %416 = vmatprep.mubr.f32.mxu0 0.0
    %417 = vmatmul.mubr.f32.gmra.mrb[0].mxu0 %v168
    %v418 = vpop.f32.mrb[0].mxu0
    %v419 = vadd.f32 %v288, %v418
    %v420 = vpop.f32.mrb[0].mxu0
    %v421 = vadd.f32 %v290, %v420
    %422 = vmatprep.mubr.f32.mxu0 0.0
    %423 = vmatmul.mubr.f32.gmra.mrb[0].mxu0 %v171
    %v424 = vpop.f32.mrb[0].mxu0
    %v425 = vadd.f32 %v294, %v424
    %v426 = vpop.f32.mrb[0].mxu0
    %v427 = vadd.f32 %v296, %v426
    %428 = vmatprep.mubr.f32.mxu0 0.0
    %429 = vmatmul.mubr.f32.gmra.mrb[0].mxu0 %v174
    %v430 = vpop.f32.mrb[0].mxu0
    %v431 = vadd.f32 %v300, %v430
    %v432 = vpop.f32.mrb[0].mxu0
    %v433 = vadd.f32 %v302, %v432
    %434 = vmatprep.mubr.f32.mxu0 0.0
    %435 = vmatmul.mubr.f32.gmra.mrb[0].mxu0 %v177
    %v436 = vpop.f32.mrb[0].mxu0
    %v437 = vadd.f32 %v306, %v436
    %v438 = vpop.f32.mrb[0].mxu0
    %v439 = vadd.f32 %v308, %v438
    %440 = vdwg.mxu0
    %441 = vst [vmem:[#allocation7] sm:$0xff] %v377
    %vm442 = vcmask 556032
    %443 = vst.msk [vmem:[#allocation7 + $0x8] sm:$0xff] %vm442, %v379
    %444 = vst [vmem:[#allocation7 + $0x10] sm:$0xff] %v383
    %445 = vst.msk [vmem:[#allocation7 + $0x18] sm:$0xff] %vm442, %v385
    %446 = vst [vmem:[#allocation7 + $0x20] sm:$0xff] %v389
    %447 = vst.msk [vmem:[#allocation7 + $0x28] sm:$0xff] %vm442, %v391
    %448 = vst [vmem:[#allocation7 + $0x30] sm:$0xff] %v395
    %449 = vst.msk [vmem:[#allocation7 + $0x38] sm:$0xff] %vm442, %v397
    %450 = vst [vmem:[#allocation7 + $0x40] sm:$0xff] %v401
    %451 = vst.msk [vmem:[#allocation7 + $0x48] sm:$0xff] %vm442, %v403
    %452 = vst [vmem:[#allocation7 + $0x50] sm:$0xff] %v407
    %453 = vst.msk [vmem:[#allocation7 + $0x58] sm:$0xff] %vm442, %v409
    %454 = vst [vmem:[#allocation7 + $0x60] sm:$0xff] %v413
    %455 = vst.msk [vmem:[#allocation7 + $0x68] sm:$0xff] %vm442, %v415
    %456 = vst [vmem:[#allocation7 + $0x70] sm:$0xff] %v419
    %457 = vst.msk [vmem:[#allocation7 + $0x78] sm:$0xff] %vm442, %v421
    %458 = vst [vmem:[#allocation7 + $0x80] sm:$0xff] %v425
    %459 = vst.msk [vmem:[#allocation7 + $0x88] sm:$0xff] %vm442, %v427
    %460 = vst [vmem:[#allocation7 + $0x90] sm:$0xff] %v431
    %461 = vst.msk [vmem:[#allocation7 + $0x98] sm:$0xff] %vm442, %v433
    %462 = vst [vmem:[#allocation7 + $0xa0] sm:$0xff] %v437
    %463 = vst.msk [vmem:[#allocation7 + $0xa8] sm:$0xff] %vm442, %v439
    // Predicated region
    $region18: #{tpu_custom_call.1} parent=1 // pred_check
      _
    $region19: #{tpu_custom_call.1} parent=1 // pred_check_branch
      %465 = sbr.rel (0) target = $region21
    $region20: #{tpu_custom_call.1} parent=1 // pred_region
      %s467 = ssub.s32 2816, 2816
      %468 = vsyncadd [#allocation4], %s467
      %s469 = sshll.u32 [#allocation7], 4
      %s470 = int_to_ptr.vmem [resolvable:$true] %s469
      %475 = dma.vmem_to_hbm [thread:$0]  %s470, 2816, %s2, [#allocation4], 256, 256, 16
    $region21: #{tpu_custom_call.1} parent=1 // pred_fallthru
      _
    // Predicated region
    $region22: #{tpu_custom_call.1} parent=1 // pred_check
      _
    $region23: #{tpu_custom_call.1} parent=1 // pred_check_branch
      %477 = sbr.rel (0) target = $region25
    $region24: #{tpu_custom_call.1} parent=1 // pred_region
      %478 = dma.done [#allocation4], 2816
    $region25: #{tpu_custom_call.1} parent=1 // pred_fallthru
      _
    %479 = vsyncpa [#allocation3], 1
    %480 = vsyncpa [#allocation6], 1
    %481 = vsyncpa [#allocation4], 1

</llo_original>
